<compile_context>
chip_gen: v7x
topology: tpu7x:2x2x1
jax: 0.10.0
libtpu: 0.0.40
codegen_flags: <defaults>
</compile_context>

<pallas_src>
import functools

import jax
import jax.numpy as jnp
from jax import lax
from jax.experimental import pallas as pl
from jax.experimental.pallas import tpu as pltpu


def _round_up(v, m):
    return (v + m - 1) // m * m


def _cdiv(a, b):
    return -(-a // b)


def _mixloss_kernel(x_ref, t_ref, g_ref, sq_ref, ce_ref, *,
                    tn, chunk, n_sub, hw, need_mask):
    """x_ref: (C, tn) logits tile; t_ref: (1, tn) integer labels;
    g_ref/sq_ref/ce_ref: (1, chunk) per-batch partial sums
    [sum x[t], sum x^2, sum CE-per-pixel]."""
    i = pl.program_id(1)            # pixel-tile index within this batch element
    tile_base = i * tn              # first global pixel index of this tile

    acc_g = jnp.zeros((1, chunk), jnp.float32)
    acc_sq = jnp.zeros((1, chunk), jnp.float32)
    acc_ce = jnp.zeros((1, chunk), jnp.float32)

    # Strip-mine the big DMA tile into small compute sub-chunks (static slices,
    # fully unrolled: n_sub <= 16).  Keeps f32 temporaries to a few vregs.
    for s in range(n_sub):
        off = s * chunk
        x = x_ref[:, pl.ds(off, chunk)].astype(jnp.float32)   # (C, chunk)
        t = t_ref[:, pl.ds(off, chunk)].astype(jnp.int32)     # (1, chunk)

        if need_mask:
            lane = lax.broadcasted_iota(jnp.int32, (1, chunk), 1)
            valid = (tile_base + off + lane) < hw              # (1, chunk) bool
            # Sanitize: garbage (possibly NaN/Inf) in the partial last block
            # must never reach exp / x*x / the gathered sum.
            x = jnp.where(valid, x, 0.0)

        cls = lax.broadcasted_iota(jnp.int32, x.shape, 0)      # (C, chunk)
        gathered = jnp.sum(jnp.where(cls == t, x, 0.0),
                           axis=0, keepdims=True)              # (1, chunk) = x[t]
        sq = jnp.sum(x * x, axis=0, keepdims=True)             # (1, chunk)

        m = jnp.max(x, axis=0, keepdims=True)                  # (1, chunk)
        lse = m + jnp.log(jnp.sum(jnp.exp(x - m), axis=0, keepdims=True))
        ce = lse - gathered
        if need_mask:
            ce = jnp.where(valid, ce, 0.0)

        acc_g = acc_g + gathered
        acc_sq = acc_sq + sq
        acc_ce = acc_ce + ce

    @pl.when(i == 0)
    def _init():
        g_ref[...] = jnp.zeros_like(g_ref)
        sq_ref[...] = jnp.zeros_like(sq_ref)
        ce_ref[...] = jnp.zeros_like(ce_ref)

    g_ref[...] += acc_g
    sq_ref[...] += acc_sq
    ce_ref[...] += acc_ce


def mix_loss(logits_nchw, target, *, smooth=1.0, weights=(1.0, 1.0)):
    """MixLoss forward: weights[0]*CrossEntropy + weights[1]*DiceLoss.

    logits_nchw: (bs, C, H, W) float (f32 or bf16 — cast in-kernel)
    target:      (bs, H, W) integer class indices in [0, C)
    """
    bs, c, h, w = logits_nchw.shape
    hw = h * w

    # Native-layout views (free reshapes): (bs, C, H*W) and (bs, 1, H*W).
    x = logits_nchw.reshape(bs, c, hw)
    if (not jnp.issubdtype(target.dtype, jnp.integer)) or target.dtype.itemsize > 4:
        target = target.astype(jnp.int32)        # only widen if necessary
    t = target.reshape(bs, 1, hw)

    x_bytes = jnp.dtype(x.dtype).itemsize
    t_bytes = jnp.dtype(t.dtype).itemsize

    # Compute sub-chunk: lane-dense, sized so ~6 f32 (C, chunk) temporaries
    # stay around <=4 MiB even for large C.
    hw_al = _round_up(hw, 128)
    chunk = max(128, min(2048, ((4 << 20) // (24 * c)) // 128 * 128, hw_al))

    # DMA tile = chunk * n_sub, budgeted against double-buffered input blocks
    # (~8 MiB) and capped at 16 sub-chunks (full unroll in-kernel).
    per_px = 2 * (c * x_bytes + t_bytes)                 # double-buffered bytes/pixel
    n_sub_budget = max(1, ((8 << 20) // per_px) // chunk)
    n_sub = int(min(_cdiv(hw_al, chunk), n_sub_budget, 16))
    tn = chunk * n_sub
    num_tiles = _cdiv(hw, tn)
    need_mask = (hw % tn) != 0                            # ragged tail handled in-kernel

    # Real per-step VMEM working set: pipelined input blocks + in-body f32
    # temporaries + the tiny resident accumulators, plus slack.
    vmem_est = (per_px * tn + 8 * c * chunk * 4 + 6 * chunk * 4 + (2 << 20))
    vmem_limit = int(min(32 << 20, max(vmem_est, 16 << 20)))

    kern = functools.partial(_mixloss_kernel, tn=tn, chunk=chunk, n_sub=n_sub,
                             hw=hw, need_mask=need_mask)

    part_sds = jax.ShapeDtypeStruct((bs, 1, chunk), jnp.float32)
    acc_spec = pl.BlockSpec((None, 1, chunk), lambda b, i: (b, 0, 0))

    g_parts, sq_parts, ce_parts = pl.pallas_call(
        kern,
        out_shape=(part_sds, part_sds, part_sds),
        grid_spec=pltpu.PrefetchScalarGridSpec(
            num_scalar_prefetch=0,
            grid=(bs, num_tiles),
            in_specs=[
                pl.BlockSpec((None, c, tn), lambda b, i: (b, 0, i)),
                pl.BlockSpec((None, 1, tn), lambda b, i: (b, 0, i)),
            ],
            out_specs=[acc_spec, acc_spec, acc_spec],
        ),
        compiler_params=pltpu.CompilerParams(
            dimension_semantics=("parallel", "arbitrary"),
            vmem_limit_bytes=vmem_limit,
        ),
    )(x, t)

    # Tiny final combine in plain JAX.
    total_n = float(bs * hw)
    intersect = jnp.sum(g_parts)
    sq_in = jnp.sum(sq_parts)
    ce_sum = jnp.sum(ce_parts)
    # sum(one_hot^2) == #pixels (labels assumed valid / in [0, C), matching
    # the reference module which has no ignore_index handling).
    sq_tg = total_n
    dice = 1.0 - (2.0 * intersect + smooth) / (sq_in + sq_tg + smooth)
    ce_mean = ce_sum / total_n
    return ce_mean * weights[0] + dice * weights[1]


def _mix_loss_ref(logits_nchw, target, *, smooth=1.0, weights=(1.0, 1.0)):
    """Pure-JAX reference mirroring the PyTorch module."""
    bs, c, h, w = logits_nchw.shape
    x = jnp.transpose(logits_nchw, (0, 2, 3, 1)).reshape(-1, c).astype(jnp.float32)
    t = target.reshape(-1)
    oh = jax.nn.one_hot(t, c, dtype=jnp.float32)
    intersect = jnp.sum(x * oh)
    dice = 1.0 - (2.0 * intersect + smooth) / (
        jnp.sum(x * x) + jnp.sum(oh * oh) + smooth)
    lse = jax.scipy.special.logsumexp(x, axis=-1)
    ce = jnp.mean(lse - jnp.sum(x * oh, axis=-1))
    return ce * weights[0] + dice * weights[1]


if __name__ == "__main__":
    num_classes = 4
    key = jax.random.PRNGKey(0)

    # Aligned case (matches the module's intended small test shape).
    bs, H, W = 2, 16, 16
    k1, k2, k3, k4 = jax.random.split(key, 4)
    logits = jax.random.normal(k1, (bs, num_classes, H, W), dtype=jnp.float32)
    target = jax.random.randint(k2, (bs, H, W), 0, num_classes, dtype=jnp.int32)
    loss = jax.block_until_ready(mix_loss(logits, target, smooth=1.0,
                                          weights=(1.0, 1.0)))
    ref = _mix_loss_ref(logits, target, smooth=1.0, weights=(1.0, 1.0))
    assert jnp.allclose(loss, ref, rtol=1e-5, atol=1e-5), (loss, ref)

    # Ragged case (H*W not a multiple of 128) — exercises the in-kernel tail
    # mask that replaced the wrapper-side jnp.pad.
    H2, W2 = 17, 17
    logits2 = jax.random.normal(k3, (bs, num_classes, H2, W2), dtype=jnp.float32)
    target2 = jax.random.randint(k4, (bs, H2, W2), 0, num_classes, dtype=jnp.int32)
    loss2 = jax.block_until_ready(mix_loss(logits2, target2, smooth=1.0,
                                           weights=(1.0, 1.0)))
    ref2 = _mix_loss_ref(logits2, target2, smooth=1.0, weights=(1.0, 1.0))
    assert jnp.allclose(loss2, ref2, rtol=1e-5, atol=1e-5), (loss2, ref2)

    print("KERNEL_OK")
</pallas_src>

<mosaic_0001>
module attributes {stable_mosaic.version = 11 : i64} {
  func.func @_mixloss_kernel(%arg0: i32, %arg1: i32, %arg2: memref<1x4x256xf32, #tpu.memory_space<vmem>>, %arg3: memref<1x1x256xi32, #tpu.memory_space<vmem>>, %arg4: memref<1x1x256xf32, #tpu.memory_space<vmem>>, %arg5: memref<1x1x256xf32, #tpu.memory_space<vmem>>, %arg6: memref<1x1x256xf32, #tpu.memory_space<vmem>>) attributes {dimension_semantics = [#tpu.dimension_semantics<parallel>, #tpu.dimension_semantics<arbitrary>], iteration_bounds = array<i64: 2, 1>, scalar_prefetch = 0 : i64, scratch_operands = 0 : i64, tpu.core_type = #tpu.core_type<tc>, window_params = [{transform_indices = @transform_0, window_bounds = array<i64: 1, 4, 256>}, {transform_indices = @transform_1, window_bounds = array<i64: 1, 1, 256>}, {transform_indices = @transform_2, window_bounds = array<i64: 1, 1, 256>}, {transform_indices = @transform_3, window_bounds = array<i64: 1, 1, 256>}, {transform_indices = @transform_4, window_bounds = array<i64: 1, 1, 256>}]} {
    %cst = arith.constant 0.000000e+00 : f32
    %0 = vector.broadcast %cst : f32 to vector<1x256xf32>
    %cst_0 = arith.constant 0.000000e+00 : f32
    %1 = vector.broadcast %cst_0 : f32 to vector<1x256xf32>
    %cst_1 = arith.constant 0.000000e+00 : f32
    %2 = vector.broadcast %cst_1 : f32 to vector<1x256xf32>
    %c0 = arith.constant 0 : index
    %c0_2 = arith.constant 0 : index
    %c0_3 = arith.constant 0 : index
    %3 = vector.load %arg2[%c0, %c0_2, %c0_3] : memref<1x4x256xf32, #tpu.memory_space<vmem>>, vector<1x4x256xf32>
    %4 = vector.shape_cast %3 : vector<1x4x256xf32> to vector<4x256xf32>
    %c0_4 = arith.constant 0 : index
    %c0_5 = arith.constant 0 : index
    %c0_6 = arith.constant 0 : index
    %5 = vector.load %arg3[%c0_4, %c0_5, %c0_6] : memref<1x1x256xi32, #tpu.memory_space<vmem>>, vector<1x1x256xi32>
    %6 = vector.shape_cast %5 : vector<1x1x256xi32> to vector<1x256xi32>
    %7 = tpu.iota {dimensions = array<i32: 0>} : vector<4x256xi32>
    %8 = vector.broadcast %6 : vector<1x256xi32> to vector<4x256xi32>
    %9 = arith.cmpi eq, %7, %8 : vector<4x256xi32>
    %cst_7 = arith.constant 0.000000e+00 : f32
    %10 = vector.broadcast %cst_7 : f32 to vector<4x256xf32>
    %11 = arith.select %9, %4, %10 : vector<4x256xi1>, vector<4x256xf32>
    %cst_8 = arith.constant dense<0.000000e+00> : vector<256xf32>
    %12 = vector.multi_reduction <add>, %11, %cst_8 [0] : vector<4x256xf32> to vector<256xf32>
    %13 = vector.shape_cast %12 : vector<256xf32> to vector<1x256xf32>
    %14 = arith.mulf %4, %4 : vector<4x256xf32>
    %cst_9 = arith.constant dense<0.000000e+00> : vector<256xf32>
    %15 = vector.multi_reduction <add>, %14, %cst_9 [0] : vector<4x256xf32> to vector<256xf32>
    %16 = vector.shape_cast %15 : vector<256xf32> to vector<1x256xf32>
    %cst_10 = arith.constant dense<0xFF800000> : vector<256xf32>
    %17 = vector.multi_reduction <maximumf>, %4, %cst_10 [0] : vector<4x256xf32> to vector<256xf32>
    %18 = vector.shape_cast %17 : vector<256xf32> to vector<1x256xf32>
    %19 = vector.broadcast %18 : vector<1x256xf32> to vector<4x256xf32>
    %20 = arith.subf %4, %19 : vector<4x256xf32>
    %21 = math.exp %20 : vector<4x256xf32>
    %cst_11 = arith.constant dense<0.000000e+00> : vector<256xf32>
    %22 = vector.multi_reduction <add>, %21, %cst_11 [0] : vector<4x256xf32> to vector<256xf32>
    %23 = vector.shape_cast %22 : vector<256xf32> to vector<1x256xf32>
    %24 = math.log %23 : vector<1x256xf32>
    %25 = arith.addf %18, %24 : vector<1x256xf32>
    %26 = arith.subf %25, %13 : vector<1x256xf32>
    %27 = arith.addf %0, %13 : vector<1x256xf32>
    %28 = arith.addf %1, %16 : vector<1x256xf32>
    %29 = arith.addf %2, %26 : vector<1x256xf32>
    %c0_i32 = arith.constant 0 : i32
    %30 = arith.cmpi eq, %arg1, %c0_i32 : i32
    %31 = arith.extui %30 : i1 to i32
    %c0_i32_12 = arith.constant 0 : i32
    %32 = arith.cmpi ne, %31, %c0_i32_12 : i32
    scf.if %32 {
      %cst_31 = arith.constant 0.000000e+00 : f32
      %51 = vector.broadcast %cst_31 : f32 to vector<1x256xf32>
      %c0_32 = arith.constant 0 : index
      %c0_33 = arith.constant 0 : index
      %c0_34 = arith.constant 0 : index
      %52 = vector.load %arg4[%c0_32, %c0_33, %c0_34] : memref<1x1x256xf32, #tpu.memory_space<vmem>>, vector<1x1x256xf32>
      %53 = vector.shape_cast %52 : vector<1x1x256xf32> to vector<1x256xf32>
      %54 = vector.shape_cast %51 : vector<1x256xf32> to vector<1x1x256xf32>
      tpu.vector_store %arg4[%c0_32, %c0_33, %c0_34], %54 {strides = array<i32>} : memref<1x1x256xf32, #tpu.memory_space<vmem>>, vector<1x1x256xf32>,
      %cst_35 = arith.constant 0.000000e+00 : f32
      %55 = vector.broadcast %cst_35 : f32 to vector<1x256xf32>
      %c0_36 = arith.constant 0 : index
      %c0_37 = arith.constant 0 : index
      %c0_38 = arith.constant 0 : index
      %56 = vector.load %arg5[%c0_36, %c0_37, %c0_38] : memref<1x1x256xf32, #tpu.memory_space<vmem>>, vector<1x1x256xf32>
      %57 = vector.shape_cast %56 : vector<1x1x256xf32> to vector<1x256xf32>
      %58 = vector.shape_cast %55 : vector<1x256xf32> to vector<1x1x256xf32>
      tpu.vector_store %arg5[%c0_36, %c0_37, %c0_38], %58 {strides = array<i32>} : memref<1x1x256xf32, #tpu.memory_space<vmem>>, vector<1x1x256xf32>,
      %cst_39 = arith.constant 0.000000e+00 : f32
      %59 = vector.broadcast %cst_39 : f32 to vector<1x256xf32>
      %c0_40 = arith.constant 0 : index
      %c0_41 = arith.constant 0 : index
      %c0_42 = arith.constant 0 : index
      %60 = vector.load %arg6[%c0_40, %c0_41, %c0_42] : memref<1x1x256xf32, #tpu.memory_space<vmem>>, vector<1x1x256xf32>
      %61 = vector.shape_cast %60 : vector<1x1x256xf32> to vector<1x256xf32>
      %62 = vector.shape_cast %59 : vector<1x256xf32> to vector<1x1x256xf32>
      tpu.vector_store %arg6[%c0_40, %c0_41, %c0_42], %62 {strides = array<i32>} : memref<1x1x256xf32, #tpu.memory_space<vmem>>, vector<1x1x256xf32>,
    } else {
    }
    %c0_13 = arith.constant 0 : index
    %c0_14 = arith.constant 0 : index
    %c0_15 = arith.constant 0 : index
    %33 = vector.load %arg4[%c0_13, %c0_14, %c0_15] : memref<1x1x256xf32, #tpu.memory_space<vmem>>, vector<1x1x256xf32>
    %34 = vector.shape_cast %33 : vector<1x1x256xf32> to vector<1x256xf32>
    %35 = arith.addf %34, %27 : vector<1x256xf32>
    %c0_16 = arith.constant 0 : index
    %c0_17 = arith.constant 0 : index
    %c0_18 = arith.constant 0 : index
    %36 = vector.load %arg4[%c0_16, %c0_17, %c0_18] : memref<1x1x256xf32, #tpu.memory_space<vmem>>, vector<1x1x256xf32>
    %37 = vector.shape_cast %36 : vector<1x1x256xf32> to vector<1x256xf32>
    %38 = vector.shape_cast %35 : vector<1x256xf32> to vector<1x1x256xf32>
    tpu.vector_store %arg4[%c0_16, %c0_17, %c0_18], %38 {strides = array<i32>} : memref<1x1x256xf32, #tpu.memory_space<vmem>>, vector<1x1x256xf32>,
    %c0_19 = arith.constant 0 : index
    %c0_20 = arith.constant 0 : index
    %c0_21 = arith.constant 0 : index
    %39 = vector.load %arg5[%c0_19, %c0_20, %c0_21] : memref<1x1x256xf32, #tpu.memory_space<vmem>>, vector<1x1x256xf32>
    %40 = vector.shape_cast %39 : vector<1x1x256xf32> to vector<1x256xf32>
    %41 = arith.addf %40, %28 : vector<1x256xf32>
    %c0_22 = arith.constant 0 : index
    %c0_23 = arith.constant 0 : index
    %c0_24 = arith.constant 0 : index
    %42 = vector.load %arg5[%c0_22, %c0_23, %c0_24] : memref<1x1x256xf32, #tpu.memory_space<vmem>>, vector<1x1x256xf32>
    %43 = vector.shape_cast %42 : vector<1x1x256xf32> to vector<1x256xf32>
    %44 = vector.shape_cast %41 : vector<1x256xf32> to vector<1x1x256xf32>
    tpu.vector_store %arg5[%c0_22, %c0_23, %c0_24], %44 {strides = array<i32>} : memref<1x1x256xf32, #tpu.memory_space<vmem>>, vector<1x1x256xf32>,
    %c0_25 = arith.constant 0 : index
    %c0_26 = arith.constant 0 : index
    %c0_27 = arith.constant 0 : index
    %45 = vector.load %arg6[%c0_25, %c0_26, %c0_27] : memref<1x1x256xf32, #tpu.memory_space<vmem>>, vector<1x1x256xf32>
    %46 = vector.shape_cast %45 : vector<1x1x256xf32> to vector<1x256xf32>
    %47 = arith.addf %46, %29 : vector<1x256xf32>
    %c0_28 = arith.constant 0 : index
    %c0_29 = arith.constant 0 : index
    %c0_30 = arith.constant 0 : index
    %48 = vector.load %arg6[%c0_28, %c0_29, %c0_30] : memref<1x1x256xf32, #tpu.memory_space<vmem>>, vector<1x1x256xf32>
    %49 = vector.shape_cast %48 : vector<1x1x256xf32> to vector<1x256xf32>
    %50 = vector.shape_cast %47 : vector<1x256xf32> to vector<1x1x256xf32>
    tpu.vector_store %arg6[%c0_28, %c0_29, %c0_30], %50 {strides = array<i32>} : memref<1x1x256xf32, #tpu.memory_space<vmem>>, vector<1x1x256xf32>,
    return
  }
  func.func @transform_0(%arg0: i32, %arg1: i32) -> (i32, i32, i32) {
    %c0_i32 = arith.constant 0 : i32
    %c0_i32_0 = arith.constant 0 : i32
    return %arg0, %c0_i32, %arg1 : i32, i32, i32
  }
  func.func @transform_1(%arg0: i32, %arg1: i32) -> (i32, i32, i32) {
    %c0_i32 = arith.constant 0 : i32
    %c0_i32_0 = arith.constant 0 : i32
    return %arg0, %c0_i32, %arg1 : i32, i32, i32
  }
  func.func @transform_2(%arg0: i32, %arg1: i32) -> (i32, i32, i32) {
    %c0_i32 = arith.constant 0 : i32
    %c0_i32_0 = arith.constant 0 : i32
    %c0_i32_1 = arith.constant 0 : i32
    return %arg0, %c0_i32, %c0_i32_0 : i32, i32, i32
  }
  func.func @transform_3(%arg0: i32, %arg1: i32) -> (i32, i32, i32) {
    %c0_i32 = arith.constant 0 : i32
    %c0_i32_0 = arith.constant 0 : i32
    %c0_i32_1 = arith.constant 0 : i32
    return %arg0, %c0_i32, %c0_i32_0 : i32, i32, i32
  }
  func.func @transform_4(%arg0: i32, %arg1: i32) -> (i32, i32, i32) {
    %c0_i32 = arith.constant 0 : i32
    %c0_i32_0 = arith.constant 0 : i32
    %c0_i32_1 = arith.constant 0 : i32
    return %arg0, %c0_i32, %c0_i32_0 : i32, i32, i32
  }
}

</mosaic_0001>

<llo_original>
// kernel: tpu_custom_call.1
$region0: #{tpu_custom_call.1}
  #allocation0 [shape = 'u32[]', space=smem, size = 0x4, offset = 0x4, fixed_abs, tag = 'smem constant byte address 0x4 - core index']
  #allocation1 [shape = 'u32[144,128]{1,0:T(1,128)}', space=vmem, size = 0x12000, scoped, tag = 'internal scratch']
  %s0 = inlined_call_operand.hbm [shape: f32[2,4,256], index: 0, kind: input, shape index: {}]
  %s1 = inlined_call_operand.hbm [shape: s32[2,1,256], index: 1, kind: input, shape index: {}]
  %s2 = inlined_call_operand.hbm [shape: f32[2,1,256], index: 2, kind: output, shape index: {0}]
  %s3 = inlined_call_operand.hbm [shape: f32[2,1,256], index: 3, kind: output, shape index: {1}]
  %s4 = inlined_call_operand.hbm [shape: f32[2,1,256], index: 4, kind: output, shape index: {2}]
  %5 = xla_tuple %s2, %s3, %s4
  %s6 = sld [smem:[#allocation0]]
  $region69: #{tpu_custom_call.1} parent=0
    _
  %s8 = ssub.s32 1, %s6
  %s9 = scalar_select 0, %s8, %s6
  $region1: #{tpu_custom_call.1} parent=0
    #allocation2 [shape = 'u8[8192]{0}', space=vmem, size = 0x2000, scoped, tag = 'input window, operand 0']
    #allocation3 [shape = 's32[2]{0}', space=sflag, size = 0x8, scoped, tag = 'scoped memory for tpu_custom_call.1']
    #allocation4 [shape = 's32[2]{0}', space=sflag, size = 0x8, scoped, tag = 'scoped memory for tpu_custom_call.1']
    #allocation5 [shape = 'u8[2048]{0}', space=vmem, size = 0x800, scoped, tag = 'input window, operand 1']
    #allocation6 [shape = 's32[2]{0}', space=sflag, size = 0x8, scoped, tag = 'scoped memory for tpu_custom_call.1']
    #allocation7 [shape = 'u8[2048]{0}', space=vmem, size = 0x800, scoped, tag = 'output window, operand 0']
    #allocation8 [shape = 'u8[2048]{0}', space=vmem, size = 0x800, scoped, tag = 'output window, operand 1']
    #allocation9 [shape = 's32[2]{0}', space=sflag, size = 0x8, scoped, tag = 'scoped memory for tpu_custom_call.1']
    #allocation10 [shape = 'u8[2048]{0}', space=vmem, size = 0x800, scoped, tag = 'output window, operand 2']
    %10 = vsyncpa [#allocation3], 0
    %s11 = scalar_lea.sflag [#allocation3], 1
    %12 = vsyncpa %s11, 0
    %13 = vsyncpa [#allocation6], 0
    %s14 = scalar_lea.sflag [#allocation6], 1
    %15 = vsyncpa %s14, 0
    %16 = vsyncpa [#allocation4], 0
    %s17 = scalar_lea.sflag [#allocation4], 1
    %18 = vsyncpa %s17, 0
    %19 = vsyncpa [#allocation9], 0
    %s20 = scalar_lea.sflag [#allocation9], 1
    %21 = vsyncpa %s20, 0
    loop: start=0, step=1, limit=4
    $region2: #{tpu_custom_call.1} parent=1 // loop_pre_header
      _
    $region3: #{tpu_custom_call.1} parent=1 // loop_header
      %s23 = sphi 0, %s27
      %p24 = scmp.ge.s32.totalorder %s23, 4
      %s30 = sphi 0, %s42
      %s31 = sphi 0, %s38
      %s32 = sphi 0, %s30
      %s33 = sphi 0, %s31
      %s34 = sphi 0, %s32
      %s35 = sphi 0, %s33
      %s47 = sphi 0, %s49
      %s50 = sphi 0, %s47
      %s51 = sphi 0, %s50
      %s67 = sphi 0, %s51
      %s75 = sphi 0, %s77
      %s78 = sphi 0, %s75
      %s79 = sphi 0, %s78
      %s95 = sphi 0, %s79
      %s101 = sphi 0, %s103
      %s104 = sphi 0, %s101
      %s105 = sphi 0, %s104
      %s121 = sphi 0, %s105
      %s127 = sphi 0, %s129
      %s130 = sphi 0, %s127
      %s131 = sphi 0, %s130
      %s147 = sphi 0, %s131
      %s153 = sphi 0, %s155
      %s156 = sphi 0, %s153
      %s157 = sphi 0, %s156
      %s173 = sphi 0, %s157
    $region4: #{tpu_custom_call.1} parent=1 // loop_header_branch
      %26 = sbr.rel (%p24) target = $region8
    $region5: #{tpu_custom_call.1} parent=1 // loop_body
      %s28 = ssub.s32 %s23, 1
      %s29 = ssub.s32 %s23, 2
      %s36 = sadd.s32 1, %s31
      %p37 = scmp.ge.s32.totalorder %s36, 1
      %s38 = scalar_select %p37, 0, %s36
      %s39 = sadd.s32 1, %s30
      %s40 = scalar_select %p37, %s39, %s30
      %p41 = scmp.ge.s32.totalorder %s40, 2
      %s42 = scalar_select %p41, 0, %s40
      %s43 = ssub.s32 %s30, %s42
      %s44 = ssub.s32 %s31, %s38
      %s45 = sor.u32 %s43, %s44
      %p46 = scmp.eq.s32.totalorder %s45, 0
      %s48 = sadd.s32 %s47, 1
      %s49 = scalar_select %p46, %s47, %s48
      %p52 = pneg %p46
      %p53 = scmp.eq.s32.totalorder %s23, 1
      %p54 = por %p52, %p53
      %p55 = scmp.ne.s32.totalorder %s47, %s50
      %p56 = scmp.eq.s32.totalorder %s23, 0
      %p57 = por %p55, %p56
      %p58 = scmp.ne.s32.totalorder %s47, %s50
      %p59 = scmp.eq.s32.totalorder %s28, 1
      %p60 = por %p58, %p59
      %p61 = scmp.ne.s32.totalorder %s50, %s51
      %p62 = scmp.eq.s32.totalorder %s28, 0
      %p63 = por %p61, %p62
      %p64 = scmp.ne.s32.totalorder %s50, %s51
      %p65 = scmp.eq.s32.totalorder %s29, 1
      %p66 = por %p64, %p65
      %p68 = scmp.ne.s32.totalorder %s51, %s67
      %p69 = scmp.eq.s32.totalorder %s29, 0
      %p70 = por %p68, %p69
      %s71 = ssub.s32 %s30, %s42
      %s72 = ssub.s32 %s31, %s38
      %s73 = sor.u32 %s71, %s72
      %p74 = scmp.eq.s32.totalorder %s73, 0
      %s76 = sadd.s32 %s75, 1
      %s77 = scalar_select %p74, %s75, %s76
      %p80 = pneg %p74
      %p81 = scmp.eq.s32.totalorder %s23, 1
      %p82 = por %p80, %p81
      %p83 = scmp.ne.s32.totalorder %s75, %s78
      %p84 = scmp.eq.s32.totalorder %s23, 0
      %p85 = por %p83, %p84
      %p86 = scmp.ne.s32.totalorder %s75, %s78
      %p87 = scmp.eq.s32.totalorder %s28, 1
      %p88 = por %p86, %p87
      %p89 = scmp.ne.s32.totalorder %s78, %s79
      %p90 = scmp.eq.s32.totalorder %s28, 0
      %p91 = por %p89, %p90
      %p92 = scmp.ne.s32.totalorder %s78, %s79
      %p93 = scmp.eq.s32.totalorder %s29, 1
      %p94 = por %p92, %p93
      %p96 = scmp.ne.s32.totalorder %s79, %s95
      %p97 = scmp.eq.s32.totalorder %s29, 0
      %p98 = por %p96, %p97
      %s99 = ssub.s32 %s30, %s42
      %p100 = scmp.eq.s32.totalorder %s99, 0
      %s102 = sadd.s32 %s101, 1
      %s103 = scalar_select %p100, %s101, %s102
      %p106 = pneg %p100
      %p107 = scmp.eq.s32.totalorder %s23, 1
      %p108 = por %p106, %p107
      %p109 = scmp.ne.s32.totalorder %s101, %s104
      %p110 = scmp.eq.s32.totalorder %s23, 0
      %p111 = por %p109, %p110
      %p112 = scmp.ne.s32.totalorder %s101, %s104
      %p113 = scmp.eq.s32.totalorder %s28, 1
      %p114 = por %p112, %p113
      %p115 = scmp.ne.s32.totalorder %s104, %s105
      %p116 = scmp.eq.s32.totalorder %s28, 0
      %p117 = por %p115, %p116
      %p118 = scmp.ne.s32.totalorder %s104, %s105
      %p119 = scmp.eq.s32.totalorder %s29, 1
      %p120 = por %p118, %p119
      %p122 = scmp.ne.s32.totalorder %s105, %s121
      %p123 = scmp.eq.s32.totalorder %s29, 0
      %p124 = por %p122, %p123
      %s125 = ssub.s32 %s30, %s42
      %p126 = scmp.eq.s32.totalorder %s125, 0
      %s128 = sadd.s32 %s127, 1
      %s129 = scalar_select %p126, %s127, %s128
      %p132 = pneg %p126
      %p133 = scmp.eq.s32.totalorder %s23, 1
      %p134 = por %p132, %p133
      %p135 = scmp.ne.s32.totalorder %s127, %s130
      %p136 = scmp.eq.s32.totalorder %s23, 0
      %p137 = por %p135, %p136
      %p138 = scmp.ne.s32.totalorder %s127, %s130
      %p139 = scmp.eq.s32.totalorder %s28, 1
      %p140 = por %p138, %p139
      %p141 = scmp.ne.s32.totalorder %s130, %s131
      %p142 = scmp.eq.s32.totalorder %s28, 0
      %p143 = por %p141, %p142
      %p144 = scmp.ne.s32.totalorder %s130, %s131
      %p145 = scmp.eq.s32.totalorder %s29, 1
      %p146 = por %p144, %p145
      %p148 = scmp.ne.s32.totalorder %s131, %s147
      %p149 = scmp.eq.s32.totalorder %s29, 0
      %p150 = por %p148, %p149
      %s151 = ssub.s32 %s30, %s42
      %p152 = scmp.eq.s32.totalorder %s151, 0
      %s154 = sadd.s32 %s153, 1
      %s155 = scalar_select %p152, %s153, %s154
      %p158 = pneg %p152
      %p159 = scmp.eq.s32.totalorder %s23, 1
      %p160 = por %p158, %p159
      %p161 = scmp.ne.s32.totalorder %s153, %s156
      %p162 = scmp.eq.s32.totalorder %s23, 0
      %p163 = por %p161, %p162
      %p164 = scmp.ne.s32.totalorder %s153, %s156
      %p165 = scmp.eq.s32.totalorder %s28, 1
      %p166 = por %p164, %p165
      %p167 = scmp.ne.s32.totalorder %s156, %s157
      %p168 = scmp.eq.s32.totalorder %s28, 0
      %p169 = por %p167, %p168
      %p170 = scmp.ne.s32.totalorder %s156, %s157
      %p171 = scmp.eq.s32.totalorder %s29, 1
      %p172 = por %p170, %p171
      %p174 = scmp.ne.s32.totalorder %s157, %s173
      %p175 = scmp.eq.s32.totalorder %s29, 0
      %p176 = por %p174, %p175
      %p177 = scmp.le.s32.totalorder 1, %s23
      %p178 = scmp.lt.s32.totalorder %s23, 3
      %p179 = pnand %p177, %p178
      %p180 = pneg %p179
      // Predicated region
      $region9: #{tpu_custom_call.1} parent=5 // pred_check
        _
      $region10: #{tpu_custom_call.1} parent=5 // pred_check_branch
        %182 = sbr.rel (%p179) target = $region12
      $region11: #{tpu_custom_call.1} parent=5 // pred_region
        %s183 = ssub.s32 %s23, 1
      $region12: #{tpu_custom_call.1} parent=5 // pred_fallthru
        _
      %p184 = scmp.lt.s32.totalorder %s23, 2
      // Predicated region
      $region13: #{tpu_custom_call.1} parent=5 // pred_check
        %p185 = pneg %p184
      $region14: #{tpu_custom_call.1} parent=5 // pred_check_branch
        %187 = sbr.rel (%p185) target = $region16
      $region15: #{tpu_custom_call.1} parent=5 // pred_region
        // Predicated region
        $region17: #{tpu_custom_call.1} parent=15 // pred_check
          %p188 = pneg %p57
        $region18: #{tpu_custom_call.1} parent=15 // pred_check_branch
          %190 = sbr.rel (%p188) target = $region20
        $region19: #{tpu_custom_call.1} parent=15 // pred_region
          %s191 = sand.u32 %s47, 1
          %s192 = scalar_lea.sflag [#allocation3], %s191
          %s193 = sand.u32 %s47, 1
          %s194 = smul.addr %s193, 8
          %s195 = scalar_lea.vmem [#allocation2], %s194
          %s196 = smul.u32 2, %s31
          %s198 = ssub.s32 128, 128
          %199 = vsyncadd %s192, %s198
          %s200 = smul.addr %s30, 2
          %s201 = sadd.s32 %s196, %s200
          %s202 = smul.addr %s201, 64
          %s203 = scalar_lea.hbm %s0, %s202
          %s205 = sshll.u32 %s195, 4
          %s206 = int_to_ptr.vmem [resolvable:$true] %s205
          %208 = dma.hbm_to_vmem [thread:$0]  %s203, 128, %s206, %s192
        $region20: #{tpu_custom_call.1} parent=15 // pred_fallthru
          _
        // Predicated region
        $region21: #{tpu_custom_call.1} parent=15 // pred_check
          %p209 = pneg %p85
        $region22: #{tpu_custom_call.1} parent=15 // pred_check_branch
          %211 = sbr.rel (%p209) target = $region24
        $region23: #{tpu_custom_call.1} parent=15 // pred_region
          %s212 = sand.u32 %s75, 1
          %s213 = scalar_lea.sflag [#allocation6], %s212
          %s214 = sand.u32 %s75, 1
          %s215 = smul.addr %s214, 2
          %s216 = scalar_lea.vmem [#allocation5], %s215
          %s217 = smul.u32 2, %s31
          %s219 = ssub.s32 32, 32
          %220 = vsyncadd %s213, %s219
          %s221 = smul.addr %s30, 2
          %s222 = sadd.s32 %s217, %s221
          %s223 = smul.addr %s222, 16
          %s224 = scalar_lea.hbm %s1, %s223
          %s226 = sshll.u32 %s216, 4
          %s227 = int_to_ptr.vmem [resolvable:$true] %s226
          %229 = dma.hbm_to_vmem [thread:$0]  %s224, 32, %s227, %s213
        $region24: #{tpu_custom_call.1} parent=15 // pred_fallthru
          _
      $region16: #{tpu_custom_call.1} parent=5 // pred_fallthru
        _
      %p230 = scmp.le.s32.totalorder 1, %s23
      %p231 = scmp.lt.s32.totalorder %s23, 3
      %p232 = pnand %p230, %p231
      %p233 = pneg %p232
      // Predicated region
      $region25: #{tpu_custom_call.1} parent=5 // pred_check
        _
      $region26: #{tpu_custom_call.1} parent=5 // pred_check_branch
        %235 = sbr.rel (%p232) target = $region28
      $region27: #{tpu_custom_call.1} parent=5 // pred_region
        %s236 = ssub.s32 %s23, 1
        %s237 = sand.u32 %s50, 1
        %s238 = scalar_lea.sflag [#allocation3], %s237
        %s239 = sand.u32 %s50, 1
        %s240 = smul.addr %s239, 8
        %s241 = scalar_lea.vmem [#allocation2], %s240
        // Predicated region
        $region29: #{tpu_custom_call.1} parent=27 // pred_check
          %p242 = pneg %p63
        $region30: #{tpu_custom_call.1} parent=27 // pred_check_branch
          %244 = sbr.rel (%p242) target = $region32
        $region31: #{tpu_custom_call.1} parent=27 // pred_region
          %245 = dma.done %s238, 128
        $region32: #{tpu_custom_call.1} parent=27 // pred_fallthru
          _
        %s246 = sand.u32 %s78, 1
        %s247 = scalar_lea.sflag [#allocation6], %s246
        %s248 = sand.u32 %s78, 1
        %s249 = smul.addr %s248, 2
        %s250 = scalar_lea.vmem [#allocation5], %s249
        // Predicated region
        $region33: #{tpu_custom_call.1} parent=27 // pred_check
          %p251 = pneg %p91
        $region34: #{tpu_custom_call.1} parent=27 // pred_check_branch
          %253 = sbr.rel (%p251) target = $region36
        $region35: #{tpu_custom_call.1} parent=27 // pred_region
          %254 = dma.done %s247, 32
        $region36: #{tpu_custom_call.1} parent=27 // pred_fallthru
          _
        %s255 = sand.u32 %s50, 1
        %s256 = scalar_lea.sflag [#allocation3], %s255
        %s257 = sand.u32 %s50, 1
        %s258 = smul.addr %s257, 8
        %s259 = scalar_lea.vmem [#allocation2], %s258
        %p260 = pneg %p63
        %p261 = pneg %p60
        %s262 = sand.u32 %s78, 1
        %s263 = scalar_lea.sflag [#allocation6], %s262
        %s264 = sand.u32 %s78, 1
        %s265 = smul.addr %s264, 2
        %s266 = scalar_lea.vmem [#allocation5], %s265
        %p267 = pneg %p91
        %p268 = pneg %p88
        %p269 = pneg %p117
        %p270 = pneg %p114
        %s271 = sand.u32 %s104, 1
        %s272 = scalar_lea.sflag [#allocation4], %s271
        %s273 = sand.u32 %s104, 1
        %s274 = smul.addr %s273, 2
        %s275 = scalar_lea.vmem [#allocation7], %s274
        %p276 = pneg %p143
        %p277 = pneg %p140
        %s278 = sand.u32 %s28, 1
        %s279 = scalar_lea.sflag [#allocation9], %s278
        %s280 = sand.u32 %s130, 1
        %s281 = smul.addr %s280, 2
        %s282 = scalar_lea.vmem [#allocation8], %s281
        %p283 = pneg %p169
        %p284 = pneg %p166
        %s285 = sand.u32 %s28, 1
        %s286 = scalar_lea.sflag [#allocation9], %s285
        %s287 = sand.u32 %s156, 1
        %s288 = smul.addr %s287, 2
        %s289 = scalar_lea.vmem [#allocation10], %s288
        %s290 = smul.u32 2, %s33
        %s291 = smul.u32 2, %s33
        %v292 = vld [vmem:[%s241] sm:$0xff]
        %v293 = vld [vmem:[%s250] sm:$0x3]
        %v294 = vlaneseq
        %v295 = vshrl.u32 %v294, 7
        %v296 = vlaneseq
        %v297 = vshrl.u32 %v296, 7
        %v298 = vsub.s32 0, %v297
        %v299 = vrot.slane %v293, %v298
        %v300 = vlaneseq
        %v301 = vshrl.u32 %v300, 7
        %v302 = vsub.s32 1, %v301
        %v303 = vrot.slane %v293, %v302
        %vm304 = vcmp.eq.s32.totalorder %v295, %v299
        %vm305 = vcmp.eq.s32.totalorder %v295, %v303
        %v307 = vcombine.high %v292, %v292
        %v309 = vsel %vm304, %v292, 0.0
        %v310 = vsel %vm305, %v307, 0.0
        %vm311 = vcmask 1043456
        %v312 = vsel %vm311, %v309, 0.0
        %v313 = vrot.slane %v312, 4
        %v314 = vadd.f32 %v312, %v313
        %v315 = vrot.slane %v314, 2
        %v316 = vadd.f32 %v314, %v315
        %v317 = vrot.slane %v316, 1
        %v318 = vadd.f32 %v316, %v317
        %v319 = vsel %vm311, %v310, 0.0
        %v320 = vrot.slane %v319, 4
        %v321 = vadd.f32 %v319, %v320
        %v322 = vrot.slane %v321, 2
        %v323 = vadd.f32 %v321, %v322
        %v324 = vrot.slane %v323, 1
        %v325 = vadd.f32 %v323, %v324
        %v326 = vmul.f32 %v292, %v292
        %v328 = vcombine.high %v326, %v326
        %v330 = vsel %vm311, %v326, 0.0
        %v331 = vrot.slane %v330, 4
        %v332 = vadd.f32 %v330, %v331
        %v333 = vrot.slane %v332, 2
        %v334 = vadd.f32 %v332, %v333
        %v335 = vrot.slane %v334, 1
        %v336 = vadd.f32 %v334, %v335
        %v337 = vsel %vm311, %v328, 0.0
        %v338 = vrot.slane %v337, 4
        %v339 = vadd.f32 %v337, %v338
        %v340 = vrot.slane %v339, 2
        %v341 = vadd.f32 %v339, %v340
        %v342 = vrot.slane %v341, 1
        %v343 = vadd.f32 %v341, %v342
        %v344 = vsel %vm311, %v292, -inf
        %v345 = vrot.slane %v344, 4
        %v346 = vmax.f32 %v344, %v345
        %v347 = vrot.slane %v346, 2
        %v348 = vmax.f32 %v346, %v347
        %v349 = vrot.slane %v348, 1
        %v350 = vmax.f32 %v348, %v349
        %v351 = vsel %vm311, %v307, -inf
        %v352 = vrot.slane %v351, 4
        %v353 = vmax.f32 %v351, %v352
        %v354 = vrot.slane %v353, 2
        %v355 = vmax.f32 %v353, %v354
        %v356 = vrot.slane %v355, 1
        %v357 = vmax.f32 %v355, %v356
        %v360 = vcombine.low %v350, %v357
        %v362 = vsub.f32 %v292, %v360
        %v363 = vmul.f32 %v362, 1.442695
        %v364 = vpow.pop %v363
        %v366 = vcombine.high %v364, %v364
        %v368 = vsel %vm311, %v364, 0.0
        %v369 = vrot.slane %v368, 4
        %v370 = vadd.f32 %v368, %v369
        %v371 = vrot.slane %v370, 2
        %v372 = vadd.f32 %v370, %v371
        %v373 = vrot.slane %v372, 1
        %v374 = vadd.f32 %v372, %v373
        %v375 = vsel %vm311, %v366, 0.0
        %v376 = vrot.slane %v375, 4
        %v377 = vadd.f32 %v375, %v376
        %v378 = vrot.slane %v377, 2
        %v379 = vadd.f32 %v377, %v378
        %v380 = vrot.slane %v379, 1
        %v381 = vadd.f32 %v379, %v380
        %v382 = vlog2.pop %v374
        %v383 = vmul.f32 %v382, 0.6931472
        %v384 = vlog2.pop %v381
        %v385 = vmul.f32 %v384, 0.6931472
        %v386 = vadd.f32 %v350, %v383
        %v387 = vadd.f32 %v357, %v385
        %v388 = vsub.f32 %v386, %v318
        %v389 = vsub.f32 %v387, %v325
        %v390 = vadd.f32 %v318, 0.0
        %v391 = vadd.f32 %v325, 0.0
        %v392 = vadd.f32 %v336, 0.0
        %v393 = vadd.f32 %v343, 0.0
        %v394 = vadd.f32 %v388, 0.0
        %v395 = vadd.f32 %v389, 0.0
        %p396 = scmp.eq.s32.totalorder %s33, 0
        // Predicated region
        $region37: #{tpu_custom_call.1} parent=27 // pred_check
          %p397 = pneg %p396
        $region38: #{tpu_custom_call.1} parent=27 // pred_check_branch
          %399 = sbr.rel (%p397) target = $region40
        $region39: #{tpu_custom_call.1} parent=27 // pred_region
          %v400 = vlaneseq
          %vm401 = vcmp.ge.s32.totalorder %v400, 0
          %vm402 = vcmp.lt.s32.totalorder %v400, 256
          %vm403 = vmand %vm401, %vm402
          %404 = vst.msk [vmem:[%s275] sm:$0x3] %vm403, 0.0
          %405 = vst.msk [vmem:[%s282] sm:$0x3] %vm403, 0.0
          %406 = vst.msk [vmem:[%s289] sm:$0x3] %vm403, 0.0
        $region40: #{tpu_custom_call.1} parent=27 // pred_fallthru
          _
        %v407 = vld [vmem:[%s275] sm:$0x3]
        %v410 = vcombine.low %v390, %v391
        %v412 = vunpack.c.l.s4 1966171168
        %v413 = vunpack.c.0.s8 %v412
        %v414 = vlaneseq
        %v415 = vshrl.u32 %v414, 7
        %v416 = vsub.s32 %v413, %v415
        %v417 = vrot.slane %v410, %v416
        %v419 = vunpack.c.l.s4 1966171168
        %v420 = vunpack.c.0.s8 %v419
        %v421 = vlaneseq
        %v422 = vshrl.u32 %v421, 7
        %v423 = vsub.s32 %v420, %v422
        %v424 = vrot.slane %v417, %v423
        %v426 = vadd.f32 %v407, %v424
        %v427 = vlaneseq
        %vm428 = vcmp.ge.s32.totalorder %v427, 0
        %vm429 = vcmp.lt.s32.totalorder %v427, 256
        %vm430 = vmand %vm428, %vm429
        %431 = vst.msk [vmem:[%s275] sm:$0x3] %vm430, %v426
        %v432 = vld [vmem:[%s282] sm:$0x3]
        %v435 = vcombine.low %v392, %v393
        %v437 = vunpack.c.l.s4 1966171168
        %v438 = vunpack.c.0.s8 %v437
        %v439 = vlaneseq
        %v440 = vshrl.u32 %v439, 7
        %v441 = vsub.s32 %v438, %v440
        %v442 = vrot.slane %v435, %v441
        %v444 = vunpack.c.l.s4 1966171168
        %v445 = vunpack.c.0.s8 %v444
        %v446 = vlaneseq
        %v447 = vshrl.u32 %v446, 7
        %v448 = vsub.s32 %v445, %v447
        %v449 = vrot.slane %v442, %v448
        %v451 = vadd.f32 %v432, %v449
        %452 = vst.msk [vmem:[%s282] sm:$0x3] %vm430, %v451
        %v453 = vld [vmem:[%s289] sm:$0x3]
        %v456 = vcombine.low %v394, %v395
        %v458 = vunpack.c.l.s4 1966171168
        %v459 = vunpack.c.0.s8 %v458
        %v460 = vlaneseq
        %v461 = vshrl.u32 %v460, 7
        %v462 = vsub.s32 %v459, %v461
        %v463 = vrot.slane %v456, %v462
        %v465 = vunpack.c.l.s4 1966171168
        %v466 = vunpack.c.0.s8 %v465
        %v467 = vlaneseq
        %v468 = vshrl.u32 %v467, 7
        %v469 = vsub.s32 %v466, %v468
        %v470 = vrot.slane %v463, %v469
        %v472 = vadd.f32 %v453, %v470
        %473 = vst.msk [vmem:[%s289] sm:$0x3] %vm430, %v472
        %s474 = sand.u32 %s104, 1
        %s475 = scalar_lea.sflag [#allocation4], %s474
        %s476 = sand.u32 %s104, 1
        %s477 = smul.addr %s476, 2
        %s478 = scalar_lea.vmem [#allocation7], %s477
        %s479 = sand.u32 %s28, 1
        %s480 = scalar_lea.sflag [#allocation9], %s479
        %s481 = sand.u32 %s130, 1
        %s482 = smul.addr %s481, 2
        %s483 = scalar_lea.vmem [#allocation8], %s482
        %s484 = sand.u32 %s28, 1
        %s485 = scalar_lea.sflag [#allocation9], %s484
        %s486 = sand.u32 %s156, 1
        %s487 = smul.addr %s486, 2
        %s488 = scalar_lea.vmem [#allocation10], %s487
        // Predicated region
        $region41: #{tpu_custom_call.1} parent=27 // pred_check
          %p489 = pneg %p114
        $region42: #{tpu_custom_call.1} parent=27 // pred_check_branch
          %491 = sbr.rel (%p489) target = $region44
        $region43: #{tpu_custom_call.1} parent=27 // pred_region
          %s493 = ssub.s32 32, 32
          %494 = vsyncadd %s475, %s493
          %s495 = smul.addr %s32, 2
          %s496 = smul.addr %s495, 16
          %s497 = scalar_lea.hbm %s2, %s496
          %s499 = sshll.u32 %s478, 4
          %s500 = int_to_ptr.vmem [resolvable:$true] %s499
          %502 = dma.vmem_to_hbm [thread:$0]  %s500, 32, %s497, %s475
        $region44: #{tpu_custom_call.1} parent=27 // pred_fallthru
          _
        // Predicated region
        $region45: #{tpu_custom_call.1} parent=27 // pred_check
          %p503 = pneg %p140
        $region46: #{tpu_custom_call.1} parent=27 // pred_check_branch
          %505 = sbr.rel (%p503) target = $region48
        $region47: #{tpu_custom_call.1} parent=27 // pred_region
          %s507 = ssub.s32 32, 32
          %508 = vsyncadd %s480, %s507
          %s509 = smul.addr %s32, 2
          %s510 = smul.addr %s509, 16
          %s511 = scalar_lea.hbm %s3, %s510
          %s513 = sshll.u32 %s483, 4
          %s514 = int_to_ptr.vmem [resolvable:$true] %s513
          %516 = dma.vmem_to_hbm [thread:$0]  %s514, 32, %s511, %s480
        $region48: #{tpu_custom_call.1} parent=27 // pred_fallthru
          _
        // Predicated region
        $region49: #{tpu_custom_call.1} parent=27 // pred_check
          %p517 = pneg %p166
        $region50: #{tpu_custom_call.1} parent=27 // pred_check_branch
          %519 = sbr.rel (%p517) target = $region52
        $region51: #{tpu_custom_call.1} parent=27 // pred_region
          %s521 = ssub.s32 32, 32
          %522 = vsyncadd %s485, %s521
          %s523 = smul.addr %s32, 2
          %s524 = smul.addr %s523, 16
          %s525 = scalar_lea.hbm %s4, %s524
          %s527 = sshll.u32 %s488, 4
          %s528 = int_to_ptr.vmem [resolvable:$true] %s527
          %530 = dma.vmem_to_hbm [thread:$0]  %s528, 32, %s525, %s485
        $region52: #{tpu_custom_call.1} parent=27 // pred_fallthru
          _
      $region28: #{tpu_custom_call.1} parent=5 // pred_fallthru
        _
      %p531 = scmp.le.s32.totalorder 2, %s23
      // Predicated region
      $region53: #{tpu_custom_call.1} parent=5 // pred_check
        %p532 = pneg %p531
      $region54: #{tpu_custom_call.1} parent=5 // pred_check_branch
        %534 = sbr.rel (%p532) target = $region56
      $region55: #{tpu_custom_call.1} parent=5 // pred_region
        %s535 = ssub.s32 %s23, 2
        // Predicated region
        $region57: #{tpu_custom_call.1} parent=55 // pred_check
          %p536 = pneg %p120
        $region58: #{tpu_custom_call.1} parent=55 // pred_check_branch
          %538 = sbr.rel (%p536) target = $region60
        $region59: #{tpu_custom_call.1} parent=55 // pred_region
          %s539 = sand.u32 %s105, 1
          %s540 = scalar_lea.sflag [#allocation4], %s539
          %s541 = sand.u32 %s105, 1
          %s542 = smul.addr %s541, 2
          %s543 = scalar_lea.vmem [#allocation7], %s542
          %544 = dma.done %s540, 32
        $region60: #{tpu_custom_call.1} parent=55 // pred_fallthru
          _
        // Predicated region
        $region61: #{tpu_custom_call.1} parent=55 // pred_check
          %p545 = pneg %p146
        $region62: #{tpu_custom_call.1} parent=55 // pred_check_branch
          %547 = sbr.rel (%p545) target = $region64
        $region63: #{tpu_custom_call.1} parent=55 // pred_region
          %s548 = sand.u32 %s29, 1
          %s549 = scalar_lea.sflag [#allocation9], %s548
          %s550 = sand.u32 %s131, 1
          %s551 = smul.addr %s550, 2
          %s552 = scalar_lea.vmem [#allocation8], %s551
          %553 = dma.done %s549, 32
        $region64: #{tpu_custom_call.1} parent=55 // pred_fallthru
          _
        // Predicated region
        $region65: #{tpu_custom_call.1} parent=55 // pred_check
          %p554 = pneg %p172
        $region66: #{tpu_custom_call.1} parent=55 // pred_check_branch
          %556 = sbr.rel (%p554) target = $region68
        $region67: #{tpu_custom_call.1} parent=55 // pred_region
          %s557 = sand.u32 %s29, 1
          %s558 = scalar_lea.sflag [#allocation9], %s557
          %s559 = sand.u32 %s157, 1
          %s560 = smul.addr %s559, 2
          %s561 = scalar_lea.vmem [#allocation10], %s560
          %562 = dma.done %s558, 32
        $region68: #{tpu_custom_call.1} parent=55 // pred_fallthru
          _
      $region56: #{tpu_custom_call.1} parent=5 // pred_fallthru
        _
    $region6: #{tpu_custom_call.1} parent=1 // loop_footer
      %s27 = sadd.s32 1, %s23
    $region7: #{tpu_custom_call.1} parent=1 // loop_footer_branch
      %22 = sbr.rel target = $region3
    $region8: #{tpu_custom_call.1} parent=1 // loop_exit
      _
    %563 = vsyncpa [#allocation3], 1
    %s564 = scalar_lea.sflag [#allocation3], 1
    %565 = vsyncpa %s564, 1
    %566 = vsyncpa [#allocation6], 1
    %s567 = scalar_lea.sflag [#allocation6], 1
    %568 = vsyncpa %s567, 1
    %569 = vsyncpa [#allocation4], 1
    %s570 = scalar_lea.sflag [#allocation4], 1
    %571 = vsyncpa %s570, 1
    %572 = vsyncpa [#allocation9], 1
    %s573 = scalar_lea.sflag [#allocation9], 1
    %574 = vsyncpa %s573, 1

</llo_original>
